<compile_context>
chip_gen: v7x
topology: tpu7x:2x2x1
jax: 0.10.0
libtpu: 0.0.40
codegen_flags: <defaults>
</compile_context>

<pallas_src>
import jax
import jax.numpy as jnp
from jax.experimental import pallas as pl
from jax.experimental.pallas import tpu as pltpu

# Small, shape-consistent hyperparameters (embedding_dim=32, ffn=64, heads=4)
EMBED = 32
FFN = 64
HEADS = 4
HEAD_DIM = EMBED // HEADS
LN_EPS = 1e-5

# ---- packed "vector" slab layout (biases + LayerNorm params), width 128 ----
_VEC_W = 128
_ROW_BQKV = 0      # cols [0, 3*EMBED): [bq*scale | bk | bv]
_ROW_BO = 1        # cols [0, EMBED)
_ROW_LN1G = 2
_ROW_LN1B = 3
_ROW_B1 = 4        # cols [0, FFN)
_ROW_B2 = 5        # cols [0, EMBED)
_ROW_LN2G = 6
_ROW_LN2B = 7
_VEC_ROWS = 8


def encoder_layer_kernel(x_ref, attn_w_ref, ffn_w_ref, vec_ref, out_ref):
    b_blk, T, C = x_ref.shape
    H, D, F = HEADS, HEAD_DIM, FFN
    N = b_blk * T            # rows processed this grid step (b-major, t-minor)
    G = H * b_blk            # merged (head, batch) attention batch axis
    cdt = attn_w_ref.dtype   # matmul compute dtype (bf16 by default)

    x = x_ref[...].astype(jnp.float32).reshape(N, C)      # (N, C)
    vec = vec_ref[...]                                     # (8, 128) f32
    attn_w = attn_w_ref[...]                               # (C, 4C) cdt

    # ---- fused QKV projection: one full-depth (K=C) matmul ------------------
    qkv = jnp.dot(x.astype(cdt), attn_w[:, :3 * C],
                  preferred_element_type=jnp.float32)      # (N, 3C)
    qkv = qkv + vec[_ROW_BQKV:_ROW_BQKV + 1, :3 * C]

    # ---- split heads: static lane slices stacked on a new leading axis ------
    # (H, N, D) -> (G, T, D) touches leading dims only (minor dim preserved).
    def heads_of(sec):
        cols = [qkv[:, sec * C + h * D: sec * C + (h + 1) * D] for h in range(H)]
        return jnp.stack(cols, axis=0).reshape(G, T, D)

    q, k, v = heads_of(0), heads_of(1), heads_of(2)

    # ---- attention: batched over merged (head, batch) axis -------------------
    s = jnp.einsum('gtd,gsd->gts', q.astype(cdt), k.astype(cdt),
                   preferred_element_type=jnp.float32)     # (G, T, T)
    s = s - jnp.max(s, axis=-1, keepdims=True)
    p = jnp.exp(s)                                         # unnormalized probs
    denom = jnp.sum(p, axis=-1, keepdims=True)             # (G, T, 1) f32
    ctx = jnp.einsum('gts,gsd->gtd', p.astype(cdt), v.astype(cdt),
                     preferred_element_type=jnp.float32)   # (G, T, D)
    # Normalize after PV: G*T*D multiplies instead of G*T*T.
    ctx = ctx * pl.reciprocal(denom, approx=True)

    # ---- merge heads (lane concat) + one full-depth output projection -------
    ctx_h = ctx.reshape(H, N, D)                           # leading dims only
    ctx2d = jnp.concatenate([ctx_h[h] for h in range(H)], axis=-1)   # (N, C)
    attn_out = jnp.dot(ctx2d.astype(cdt), attn_w[:, 3 * C:],
                       preferred_element_type=jnp.float32)            # (N, C)
    attn_out = attn_out + vec[_ROW_BO:_ROW_BO + 1, :C]

    # ---- residual + LayerNorm #1 (f32 elementwise; dropout = identity) ------
    x1 = x + attn_out
    mu1 = jnp.mean(x1, axis=-1, keepdims=True)
    var1 = jnp.mean((x1 - mu1) ** 2, axis=-1, keepdims=True)
    x1 = (x1 - mu1) * jax.lax.rsqrt(var1 + LN_EPS)
    x1 = x1 * vec[_ROW_LN1G:_ROW_LN1G + 1, :C] + vec[_ROW_LN1B:_ROW_LN1B + 1, :C]

    # ---- FFN: relu(fc1) -> fc2 ------------------------------------------------
    ffn_w = ffn_w_ref[...]                 # (C + F, F) cdt
    w1 = ffn_w[:C, :]                      # (C, F)
    w2 = ffn_w[C:, :C]                     # (F, C)
    h1 = jnp.dot(x1.astype(cdt), w1, preferred_element_type=jnp.float32)
    h1 = jnp.maximum(h1 + vec[_ROW_B1:_ROW_B1 + 1, :F], 0.0)
    h2 = jnp.dot(h1.astype(cdt), w2, preferred_element_type=jnp.float32)
    h2 = h2 + vec[_ROW_B2:_ROW_B2 + 1, :C]

    # ---- residual + LayerNorm #2 ---------------------------------------------
    x2 = x1 + h2
    mu2 = jnp.mean(x2, axis=-1, keepdims=True)
    var2 = jnp.mean((x2 - mu2) ** 2, axis=-1, keepdims=True)
    x2 = (x2 - mu2) * jax.lax.rsqrt(var2 + LN_EPS)
    x2 = x2 * vec[_ROW_LN2G:_ROW_LN2G + 1, :C] + vec[_ROW_LN2B:_ROW_LN2B + 1, :C]

    out_ref[...] = x2.reshape(b_blk, T, C).astype(out_ref.dtype)


def init_params(key, embed=EMBED, ffn=FFN):
    """Deterministic synthetic parameters. Linear weights stored transposed to
    (in, out) so forward is x @ W (== torch x @ weight.T)."""
    ks = jax.random.split(key, 16)

    def w(k, fin, fout, scale=0.02):
        return jax.random.normal(k, (fin, fout), jnp.float32) * scale

    def b(k, fout, scale=0.02):
        return jax.random.normal(k, (1, fout), jnp.float32) * scale

    return dict(
        wq=w(ks[0], embed, embed), bq=b(ks[1], embed),
        wk=w(ks[2], embed, embed), bk=b(ks[3], embed),
        wv=w(ks[4], embed, embed), bv=b(ks[5], embed),
        wo=w(ks[6], embed, embed), bo=b(ks[7], embed),
        ln1_g=jnp.ones((1, embed), jnp.float32),
        ln1_b=jnp.zeros((1, embed), jnp.float32),
        w1=w(ks[8], embed, ffn), b1=b(ks[9], ffn),
        w2=w(ks[10], ffn, embed), b2=b(ks[11], embed),
        ln2_g=jnp.ones((1, embed), jnp.float32),
        ln2_b=jnp.zeros((1, embed), jnp.float32),
    )


def pack_params(params, compute_dtype=jnp.bfloat16):
    """Pack the 16 parameter tensors into 3 lane-friendly slabs:
      attn_w : (C, 4C) = [Wq*scale | Wk | Wv | Wo]   (compute dtype, 128 lanes)
      ffn_w  : (C+F, F) = [W1 ; W2 padded to F cols]  (compute dtype)
      vec    : (8, 128)  = biases + LayerNorm gamma/beta (float32)
    The 1/sqrt(head_dim) q-scaling is folded into Wq / bq here."""
    C, F, D = EMBED, FFN, HEAD_DIM
    scaling = float(D) ** -0.5

    attn_w = jnp.concatenate(
        [params["wq"] * scaling, params["wk"], params["wv"], params["wo"]],
        axis=1).astype(compute_dtype)                                  # (C, 4C)

    w2_pad = jnp.pad(params["w2"], ((0, 0), (0, F - C)))               # (F, F)
    ffn_w = jnp.concatenate([params["w1"], w2_pad], axis=0).astype(compute_dtype)

    def row(v):
        v = jnp.reshape(v, (-1,)).astype(jnp.float32)
        return jnp.pad(v, (0, _VEC_W - v.shape[0]))

    bqkv = jnp.concatenate(
        [params["bq"][0] * scaling, params["bk"][0], params["bv"][0]])  # (3C,)
    vec = jnp.stack([row(bqkv), row(params["bo"]),
                     row(params["ln1_g"]), row(params["ln1_b"]),
                     row(params["b1"]), row(params["b2"]),
                     row(params["ln2_g"]), row(params["ln2_b"])], axis=0)
    return attn_w, ffn_w, vec


def _step_vmem_bytes(b_blk, T, C=EMBED, H=HEADS, F=FFN):
    """Rough per-grid-step VMEM footprint (inputs/outputs double-buffered plus
    the main in-kernel intermediates), used for tiling and vmem_limit_bytes."""
    D = C // H
    N = b_blk * T
    G = H * b_blk
    io = 2 * 2 * (b_blk * T * C * 4)                            # x + out blocks
    weights = 2 * 2 * (C * 4 * C + (C + F) * F) + 2 * (_VEC_ROWS * _VEC_W * 4)
    inter = (N * 3 * C * 6            # qkv f32 + bf16 copies
             + 3 * G * T * D * 6      # q / k / v
             + 2 * G * T * T * 4      # s, p (f32)
             + G * T * D * 4          # ctx
             + 3 * N * C * 4          # attn_out, x1, x2
             + N * F * 4)             # ffn hidden
    return io + weights + inter


def _pick_b_blk(B, T, cap_bytes=24 * 2 ** 20):
    """Largest batch block that fits the per-step VMEM cap, preferring a grid
    with >= 2 steps so both v7x TensorCores get work (v5e/v6e: 1 TC, neutral)."""
    divisors = [d for d in range(1, B + 1) if B % d == 0]
    fits = [d for d in divisors if _step_vmem_bytes(d, T) <= cap_bytes] or [1]
    multi = [d for d in fits if B // d >= 2]
    return max(multi) if multi else max(fits)


def transformer_encoder_layer(x_tbc, params, *, compute_dtype=jnp.bfloat16,
                              b_blk=None):
    """x_tbc: (T, B, C) float32 (fairseq seq-first layout).
    Returns (y_tbc, attn) with attn=None (need_weights=False path)."""
    T, B, C = x_tbc.shape
    assert C == EMBED

    # One XLA transpose each way; see module TODO about removing these at
    # production sizes (allow_input_fusion / seq-major blocking).
    x_btc = jnp.transpose(x_tbc, (1, 0, 2))          # (B, T, C)

    attn_w, ffn_w, vec = pack_params(params, compute_dtype)

    if b_blk is None:
        b_blk = _pick_b_blk(B, T)
    assert B % b_blk == 0
    grid = (B // b_blk,)

    # Explicit scoped-VMEM limit: 2x per-step estimate with a floor of 32 MiB,
    # clamped below v7x's 64 MiB physical VMEM (v5e/v6e have 128 MiB).
    vmem_limit = int(min(max(2 * _step_vmem_bytes(b_blk, T), 32 * 2 ** 20),
                         48 * 2 ** 20))

    def _const2d(i):
        return (0, 0)

    y_btc = pl.pallas_call(
        encoder_layer_kernel,
        out_shape=jax.ShapeDtypeStruct((B, T, C), x_tbc.dtype),
        grid=grid,
        in_specs=[
            pl.BlockSpec((b_blk, T, C), lambda i: (i, 0, 0)),
            pl.BlockSpec(attn_w.shape, _const2d),
            pl.BlockSpec(ffn_w.shape, _const2d),
            pl.BlockSpec(vec.shape, _const2d),
        ],
        out_specs=pl.BlockSpec((b_blk, T, C), lambda i: (i, 0, 0)),
        compiler_params=pltpu.CompilerParams(
            dimension_semantics=("parallel",),
            vmem_limit_bytes=vmem_limit),
    )(x_btc, attn_w, ffn_w, vec)

    return jnp.transpose(y_btc, (1, 0, 2)), None      # back to (T, B, C)


# ---------------------------- pure-JAX reference ----------------------------
def _layer_norm(x, g, b):
    mu = jnp.mean(x, axis=-1, keepdims=True)
    var = jnp.mean((x - mu) ** 2, axis=-1, keepdims=True)
    return (x - mu) * jax.lax.rsqrt(var + LN_EPS) * g + b


def reference_encoder_layer(x_tbc, params):
    T, B, C = x_tbc.shape
    H, D = HEADS, HEAD_DIM
    x = jnp.transpose(x_tbc, (1, 0, 2)).astype(jnp.float32)       # (B, T, C)
    scaling = float(D) ** -0.5

    q = (x @ params["wq"] + params["bq"]) * scaling
    k = x @ params["wk"] + params["bk"]
    v = x @ params["wv"] + params["bv"]

    def split(t):
        return t.reshape(B, T, H, D).transpose(0, 2, 1, 3)        # (B, H, T, D)

    qh, kh, vh = split(q), split(k), split(v)
    s = jnp.einsum("bhtd,bhsd->bhts", qh, kh)
    p = jax.nn.softmax(s, axis=-1)
    ctx = jnp.einsum("bhts,bhsd->bhtd", p, vh)
    ctx = ctx.transpose(0, 2, 1, 3).reshape(B, T, C)
    attn_out = ctx @ params["wo"] + params["bo"]

    x1 = _layer_norm(x + attn_out, params["ln1_g"], params["ln1_b"])
    h = jax.nn.relu(x1 @ params["w1"] + params["b1"])
    y = h @ params["w2"] + params["b2"]
    x2 = _layer_norm(x1 + y, params["ln2_g"], params["ln2_b"])
    return jnp.transpose(x2, (1, 0, 2))


if __name__ == "__main__":
    key = jax.random.PRNGKey(0)
    kx, kp = jax.random.split(key)

    T, B = 8, 2                                   # seq_len=8, batch=2, embed=32
    x = jax.random.normal(kx, (T, B, EMBED), dtype=jnp.float32)
    params = init_params(kp)

    y, attn = transformer_encoder_layer(x, params)
    jax.block_until_ready(y)
    assert y.shape == (T, B, EMBED)
    assert attn is None

    y_ref = reference_encoder_layer(x, params)
    err = float(jnp.max(jnp.abs(y - y_ref)))
    assert err < 1e-1, f"kernel/reference mismatch: max abs err {err}"

    print("KERNEL_OK")
</pallas_src>

<mosaic_0001>
module attributes {stable_mosaic.version = 11 : i64} {
  func.func @encoder_layer_kernel(%arg0: i32, %arg1: memref<1x8x32xf32, #tpu.memory_space<vmem>>, %arg2: memref<32x128xbf16, #tpu.memory_space<vmem>>, %arg3: memref<96x64xbf16, #tpu.memory_space<vmem>>, %arg4: memref<8x128xf32, #tpu.memory_space<vmem>>, %arg5: memref<1x8x32xf32, #tpu.memory_space<vmem>>) attributes {dimension_semantics = [#tpu.dimension_semantics<parallel>], iteration_bounds = array<i64: 2>, scalar_prefetch = 0 : i64, scratch_operands = 0 : i64, tpu.core_type = #tpu.core_type<tc>, window_params = [{transform_indices = @transform_0, window_bounds = array<i64: 1, 8, 32>}, {pipeline_mode = #tpu.pipeline_mode<synchronous>, transform_indices = @transform_1, window_bounds = array<i64: 32, 128>}, {pipeline_mode = #tpu.pipeline_mode<synchronous>, transform_indices = @transform_2, window_bounds = array<i64: 96, 64>}, {pipeline_mode = #tpu.pipeline_mode<synchronous>, transform_indices = @transform_3, window_bounds = array<i64: 8, 128>}, {transform_indices = @transform_4, window_bounds = array<i64: 1, 8, 32>}]} {
    %c0 = arith.constant 0 : index
    %c0_0 = arith.constant 0 : index
    %c0_1 = arith.constant 0 : index
    %0 = vector.load %arg1[%c0, %c0_0, %c0_1] : memref<1x8x32xf32, #tpu.memory_space<vmem>>, vector<1x8x32xf32>
    %1 = vector.shape_cast %0 : vector<1x8x32xf32> to vector<8x32xf32>
    %c0_2 = arith.constant 0 : index
    %c0_3 = arith.constant 0 : index
    %2 = vector.load %arg4[%c0_2, %c0_3] : memref<8x128xf32, #tpu.memory_space<vmem>>, vector<8x128xf32>
    %c0_4 = arith.constant 0 : index
    %c0_5 = arith.constant 0 : index
    %3 = vector.load %arg2[%c0_4, %c0_5] : memref<32x128xbf16, #tpu.memory_space<vmem>>, vector<32x128xbf16>
    %4 = arith.truncf %1 : vector<8x32xf32> to vector<8x32xbf16>
    %5 = vector.extract_strided_slice %3 {offsets = [0, 0], sizes = [32, 96], strides = [1, 1]} : vector<32x128xbf16> to vector<32x96xbf16>
    %cst = arith.constant dense<0.000000e+00> : vector<8x96xf32>
    %6 = tpu.matmul %4, %5, %cst {dimension_numbers = #tpu.dot_dimension_numbers<[1], [0], [0], [1], [0, 0, 1, 1], [], []>} : vector<8x32xbf16>, vector<32x96xbf16>, vector<8x96xf32> -> vector<8x96xf32>
    %7 = vector.extract_strided_slice %2 {offsets = [0, 0], sizes = [1, 96], strides = [1, 1]} : vector<8x128xf32> to vector<1x96xf32>
    %8 = vector.broadcast %7 : vector<1x96xf32> to vector<8x96xf32>
    %9 = arith.addf %6, %8 : vector<8x96xf32>
    %10 = vector.extract_strided_slice %9 {offsets = [0, 0], sizes = [8, 8], strides = [1, 1]} : vector<8x96xf32> to vector<8x8xf32>
    %11 = vector.extract_strided_slice %9 {offsets = [0, 8], sizes = [8, 8], strides = [1, 1]} : vector<8x96xf32> to vector<8x8xf32>
    %12 = vector.extract_strided_slice %9 {offsets = [0, 16], sizes = [8, 8], strides = [1, 1]} : vector<8x96xf32> to vector<8x8xf32>
    %13 = vector.extract_strided_slice %9 {offsets = [0, 24], sizes = [8, 8], strides = [1, 1]} : vector<8x96xf32> to vector<8x8xf32>
    %14 = vector.shape_cast %10 : vector<8x8xf32> to vector<1x8x8xf32>
    %15 = vector.shape_cast %11 : vector<8x8xf32> to vector<1x8x8xf32>
    %16 = vector.shape_cast %12 : vector<8x8xf32> to vector<1x8x8xf32>
    %17 = vector.shape_cast %13 : vector<8x8xf32> to vector<1x8x8xf32>
    %18 = tpu.concatenate %14, %15, %16, %17 in 0 : vector<1x8x8xf32>, vector<1x8x8xf32>, vector<1x8x8xf32>, vector<1x8x8xf32> -> vector<4x8x8xf32>
    %19 = vector.extract_strided_slice %9 {offsets = [0, 32], sizes = [8, 8], strides = [1, 1]} : vector<8x96xf32> to vector<8x8xf32>
    %20 = vector.extract_strided_slice %9 {offsets = [0, 40], sizes = [8, 8], strides = [1, 1]} : vector<8x96xf32> to vector<8x8xf32>
    %21 = vector.extract_strided_slice %9 {offsets = [0, 48], sizes = [8, 8], strides = [1, 1]} : vector<8x96xf32> to vector<8x8xf32>
    %22 = vector.extract_strided_slice %9 {offsets = [0, 56], sizes = [8, 8], strides = [1, 1]} : vector<8x96xf32> to vector<8x8xf32>
    %23 = vector.shape_cast %19 : vector<8x8xf32> to vector<1x8x8xf32>
    %24 = vector.shape_cast %20 : vector<8x8xf32> to vector<1x8x8xf32>
    %25 = vector.shape_cast %21 : vector<8x8xf32> to vector<1x8x8xf32>
    %26 = vector.shape_cast %22 : vector<8x8xf32> to vector<1x8x8xf32>
    %27 = tpu.concatenate %23, %24, %25, %26 in 0 : vector<1x8x8xf32>, vector<1x8x8xf32>, vector<1x8x8xf32>, vector<1x8x8xf32> -> vector<4x8x8xf32>
    %28 = vector.extract_strided_slice %9 {offsets = [0, 64], sizes = [8, 8], strides = [1, 1]} : vector<8x96xf32> to vector<8x8xf32>
    %29 = vector.extract_strided_slice %9 {offsets = [0, 72], sizes = [8, 8], strides = [1, 1]} : vector<8x96xf32> to vector<8x8xf32>
    %30 = vector.extract_strided_slice %9 {offsets = [0, 80], sizes = [8, 8], strides = [1, 1]} : vector<8x96xf32> to vector<8x8xf32>
    %31 = vector.extract_strided_slice %9 {offsets = [0, 88], sizes = [8, 8], strides = [1, 1]} : vector<8x96xf32> to vector<8x8xf32>
    %32 = vector.shape_cast %28 : vector<8x8xf32> to vector<1x8x8xf32>
    %33 = vector.shape_cast %29 : vector<8x8xf32> to vector<1x8x8xf32>
    %34 = vector.shape_cast %30 : vector<8x8xf32> to vector<1x8x8xf32>
    %35 = vector.shape_cast %31 : vector<8x8xf32> to vector<1x8x8xf32>
    %36 = tpu.concatenate %32, %33, %34, %35 in 0 : vector<1x8x8xf32>, vector<1x8x8xf32>, vector<1x8x8xf32>, vector<1x8x8xf32> -> vector<4x8x8xf32>
    %37 = arith.truncf %18 : vector<4x8x8xf32> to vector<4x8x8xbf16>
    %38 = arith.truncf %27 : vector<4x8x8xf32> to vector<4x8x8xbf16>
    "tpu.trace_start"() <{level = 10 : i32, message = "gtd,gsd->gts"}> : () -> ()
    %cst_6 = arith.constant dense<0.000000e+00> : vector<4x8x8xf32>
    %39 = tpu.matmul %37, %38, %cst_6 {dimension_numbers = #tpu.dot_dimension_numbers<[2], [2], [1], [1], [0, 0, 0, 1, 1, 1], [0], [0]>} : vector<4x8x8xbf16>, vector<4x8x8xbf16>, vector<4x8x8xf32> -> vector<4x8x8xf32>
    "tpu.trace_stop"() : () -> ()
    %cst_7 = arith.constant dense<0xFF800000> : vector<4x8xf32>
    %40 = vector.multi_reduction <maximumf>, %39, %cst_7 [2] : vector<4x8x8xf32> to vector<4x8xf32>
    %41 = vector.shape_cast %40 : vector<4x8xf32> to vector<4x8x1xf32>
    %42 = vector.broadcast %41 : vector<4x8x1xf32> to vector<4x8x8xf32>
    %43 = arith.subf %39, %42 : vector<4x8x8xf32>
    %44 = math.exp %43 : vector<4x8x8xf32>
    %cst_8 = arith.constant dense<0.000000e+00> : vector<4x8xf32>
    %45 = vector.multi_reduction <add>, %44, %cst_8 [2] : vector<4x8x8xf32> to vector<4x8xf32>
    %46 = vector.shape_cast %45 : vector<4x8xf32> to vector<4x8x1xf32>
    %47 = arith.truncf %44 : vector<4x8x8xf32> to vector<4x8x8xbf16>
    %48 = arith.truncf %36 : vector<4x8x8xf32> to vector<4x8x8xbf16>
    "tpu.trace_start"() <{level = 10 : i32, message = "gts,gsd->gtd"}> : () -> ()
    %cst_9 = arith.constant dense<0.000000e+00> : vector<4x8x8xf32>
    %49 = tpu.matmul %47, %48, %cst_9 {dimension_numbers = #tpu.dot_dimension_numbers<[2], [1], [1], [2], [0, 0, 0, 1, 1, 2], [0], [0]>} : vector<4x8x8xbf16>, vector<4x8x8xbf16>, vector<4x8x8xf32> -> vector<4x8x8xf32>
    "tpu.trace_stop"() : () -> ()
    %50 = tpu.reciprocal %46 {approx = true} : vector<4x8x1xf32> -> vector<4x8x1xf32>
    %51 = vector.broadcast %50 : vector<4x8x1xf32> to vector<4x8x8xf32>
    %52 = arith.mulf %49, %51 : vector<4x8x8xf32>
    %53 = vector.extract_strided_slice %52 {offsets = [0, 0, 0], sizes = [1, 8, 8], strides = [1, 1, 1]} : vector<4x8x8xf32> to vector<1x8x8xf32>
    %54 = vector.shape_cast %53 : vector<1x8x8xf32> to vector<8x8xf32>
    %55 = vector.extract_strided_slice %52 {offsets = [1, 0, 0], sizes = [1, 8, 8], strides = [1, 1, 1]} : vector<4x8x8xf32> to vector<1x8x8xf32>
    %56 = vector.shape_cast %55 : vector<1x8x8xf32> to vector<8x8xf32>
    %57 = vector.extract_strided_slice %52 {offsets = [2, 0, 0], sizes = [1, 8, 8], strides = [1, 1, 1]} : vector<4x8x8xf32> to vector<1x8x8xf32>
    %58 = vector.shape_cast %57 : vector<1x8x8xf32> to vector<8x8xf32>
    %59 = vector.extract_strided_slice %52 {offsets = [3, 0, 0], sizes = [1, 8, 8], strides = [1, 1, 1]} : vector<4x8x8xf32> to vector<1x8x8xf32>
    %60 = vector.shape_cast %59 : vector<1x8x8xf32> to vector<8x8xf32>
    %61 = tpu.concatenate %54, %56, %58, %60 in 1 : vector<8x8xf32>, vector<8x8xf32>, vector<8x8xf32>, vector<8x8xf32> -> vector<8x32xf32>
    %62 = arith.truncf %61 : vector<8x32xf32> to vector<8x32xbf16>
    %63 = vector.extract_strided_slice %3 {offsets = [0, 96], sizes = [32, 32], strides = [1, 1]} : vector<32x128xbf16> to vector<32x32xbf16>
    %cst_10 = arith.constant dense<0.000000e+00> : vector<8x32xf32>
    %64 = tpu.matmul %62, %63, %cst_10 {dimension_numbers = #tpu.dot_dimension_numbers<[1], [0], [0], [1], [0, 0, 1, 1], [], []>} : vector<8x32xbf16>, vector<32x32xbf16>, vector<8x32xf32> -> vector<8x32xf32>
    %65 = vector.extract_strided_slice %2 {offsets = [1, 0], sizes = [1, 32], strides = [1, 1]} : vector<8x128xf32> to vector<1x32xf32>
    %66 = vector.broadcast %65 : vector<1x32xf32> to vector<8x32xf32>
    %67 = arith.addf %64, %66 : vector<8x32xf32>
    %68 = arith.addf %1, %67 : vector<8x32xf32>
    %cst_11 = arith.constant dense<0.000000e+00> : vector<8xf32>
    %69 = vector.multi_reduction <add>, %68, %cst_11 [1] : vector<8x32xf32> to vector<8xf32>
    %70 = vector.shape_cast %69 : vector<8xf32> to vector<8x1xf32>
    %cst_12 = arith.constant 3.200000e+01 : f32
    %71 = vector.broadcast %cst_12 : f32 to vector<8x1xf32>
    %72 = arith.divf %70, %71 : vector<8x1xf32>
    %73 = vector.broadcast %72 : vector<8x1xf32> to vector<8x32xf32>
    %74 = arith.subf %68, %73 : vector<8x32xf32>
    %75 = arith.mulf %74, %74 : vector<8x32xf32>
    %cst_13 = arith.constant dense<0.000000e+00> : vector<8xf32>
    %76 = vector.multi_reduction <add>, %75, %cst_13 [1] : vector<8x32xf32> to vector<8xf32>
    %77 = vector.shape_cast %76 : vector<8xf32> to vector<8x1xf32>
    %cst_14 = arith.constant 3.200000e+01 : f32
    %78 = vector.broadcast %cst_14 : f32 to vector<8x1xf32>
    %79 = arith.divf %77, %78 : vector<8x1xf32>
    %80 = vector.broadcast %72 : vector<8x1xf32> to vector<8x32xf32>
    %81 = arith.subf %68, %80 : vector<8x32xf32>
    %cst_15 = arith.constant 9.99999974E-6 : f32
    %82 = vector.broadcast %cst_15 : f32 to vector<8x1xf32>
    %83 = arith.addf %79, %82 : vector<8x1xf32>
    %84 = math.rsqrt %83 : vector<8x1xf32>
    %85 = vector.broadcast %84 : vector<8x1xf32> to vector<8x32xf32>
    %86 = arith.mulf %81, %85 : vector<8x32xf32>
    %87 = vector.extract_strided_slice %2 {offsets = [2, 0], sizes = [1, 32], strides = [1, 1]} : vector<8x128xf32> to vector<1x32xf32>
    %88 = vector.broadcast %87 : vector<1x32xf32> to vector<8x32xf32>
    %89 = arith.mulf %86, %88 : vector<8x32xf32>
    %90 = vector.extract_strided_slice %2 {offsets = [3, 0], sizes = [1, 32], strides = [1, 1]} : vector<8x128xf32> to vector<1x32xf32>
    %91 = vector.broadcast %90 : vector<1x32xf32> to vector<8x32xf32>
    %92 = arith.addf %89, %91 : vector<8x32xf32>
    %c0_16 = arith.constant 0 : index
    %c0_17 = arith.constant 0 : index
    %93 = vector.load %arg3[%c0_16, %c0_17] : memref<96x64xbf16, #tpu.memory_space<vmem>>, vector<96x64xbf16>
    %94 = vector.extract_strided_slice %93 {offsets = [0, 0], sizes = [32, 64], strides = [1, 1]} : vector<96x64xbf16> to vector<32x64xbf16>
    %95 = vector.extract_strided_slice %93 {offsets = [32, 0], sizes = [64, 32], strides = [1, 1]} : vector<96x64xbf16> to vector<64x32xbf16>
    %96 = arith.truncf %92 : vector<8x32xf32> to vector<8x32xbf16>
    %cst_18 = arith.constant dense<0.000000e+00> : vector<8x64xf32>
    %97 = tpu.matmul %96, %94, %cst_18 {dimension_numbers = #tpu.dot_dimension_numbers<[1], [0], [0], [1], [0, 0, 1, 1], [], []>} : vector<8x32xbf16>, vector<32x64xbf16>, vector<8x64xf32> -> vector<8x64xf32>
    %98 = vector.extract_strided_slice %2 {offsets = [4, 0], sizes = [1, 64], strides = [1, 1]} : vector<8x128xf32> to vector<1x64xf32>
    %99 = vector.broadcast %98 : vector<1x64xf32> to vector<8x64xf32>
    %100 = arith.addf %97, %99 : vector<8x64xf32>
    %cst_19 = arith.constant 0.000000e+00 : f32
    %101 = vector.broadcast %cst_19 : f32 to vector<8x64xf32>
    %102 = arith.maximumf %100, %101 : vector<8x64xf32>
    %103 = arith.truncf %102 : vector<8x64xf32> to vector<8x64xbf16>
    %cst_20 = arith.constant dense<0.000000e+00> : vector<8x32xf32>
    %104 = tpu.matmul %103, %95, %cst_20 {dimension_numbers = #tpu.dot_dimension_numbers<[1], [0], [0], [1], [0, 0, 1, 1], [], []>} : vector<8x64xbf16>, vector<64x32xbf16>, vector<8x32xf32> -> vector<8x32xf32>
    %105 = vector.extract_strided_slice %2 {offsets = [5, 0], sizes = [1, 32], strides = [1, 1]} : vector<8x128xf32> to vector<1x32xf32>
    %106 = vector.broadcast %105 : vector<1x32xf32> to vector<8x32xf32>
    %107 = arith.addf %104, %106 : vector<8x32xf32>
    %108 = arith.addf %92, %107 : vector<8x32xf32>
    %cst_21 = arith.constant dense<0.000000e+00> : vector<8xf32>
    %109 = vector.multi_reduction <add>, %108, %cst_21 [1] : vector<8x32xf32> to vector<8xf32>
    %110 = vector.shape_cast %109 : vector<8xf32> to vector<8x1xf32>
    %cst_22 = arith.constant 3.200000e+01 : f32
    %111 = vector.broadcast %cst_22 : f32 to vector<8x1xf32>
    %112 = arith.divf %110, %111 : vector<8x1xf32>
    %113 = vector.broadcast %112 : vector<8x1xf32> to vector<8x32xf32>
    %114 = arith.subf %108, %113 : vector<8x32xf32>
    %115 = arith.mulf %114, %114 : vector<8x32xf32>
    %cst_23 = arith.constant dense<0.000000e+00> : vector<8xf32>
    %116 = vector.multi_reduction <add>, %115, %cst_23 [1] : vector<8x32xf32> to vector<8xf32>
    %117 = vector.shape_cast %116 : vector<8xf32> to vector<8x1xf32>
    %cst_24 = arith.constant 3.200000e+01 : f32
    %118 = vector.broadcast %cst_24 : f32 to vector<8x1xf32>
    %119 = arith.divf %117, %118 : vector<8x1xf32>
    %120 = vector.broadcast %112 : vector<8x1xf32> to vector<8x32xf32>
    %121 = arith.subf %108, %120 : vector<8x32xf32>
    %cst_25 = arith.constant 9.99999974E-6 : f32
    %122 = vector.broadcast %cst_25 : f32 to vector<8x1xf32>
    %123 = arith.addf %119, %122 : vector<8x1xf32>
    %124 = math.rsqrt %123 : vector<8x1xf32>
    %125 = vector.broadcast %124 : vector<8x1xf32> to vector<8x32xf32>
    %126 = arith.mulf %121, %125 : vector<8x32xf32>
    %127 = vector.extract_strided_slice %2 {offsets = [6, 0], sizes = [1, 32], strides = [1, 1]} : vector<8x128xf32> to vector<1x32xf32>
    %128 = vector.broadcast %127 : vector<1x32xf32> to vector<8x32xf32>
    %129 = arith.mulf %126, %128 : vector<8x32xf32>
    %130 = vector.extract_strided_slice %2 {offsets = [7, 0], sizes = [1, 32], strides = [1, 1]} : vector<8x128xf32> to vector<1x32xf32>
    %131 = vector.broadcast %130 : vector<1x32xf32> to vector<8x32xf32>
    %132 = arith.addf %129, %131 : vector<8x32xf32>
    %133 = vector.shape_cast %132 : vector<8x32xf32> to vector<1x8x32xf32>
    %c0_26 = arith.constant 0 : index
    %c0_27 = arith.constant 0 : index
    %c0_28 = arith.constant 0 : index
    %134 = vector.load %arg5[%c0_26, %c0_27, %c0_28] : memref<1x8x32xf32, #tpu.memory_space<vmem>>, vector<1x8x32xf32>
    tpu.vector_store %arg5[%c0_26, %c0_27, %c0_28], %133 {strides = array<i32>} : memref<1x8x32xf32, #tpu.memory_space<vmem>>, vector<1x8x32xf32>,
    return
  }
  func.func @transform_0(%arg0: i32) -> (i32, i32, i32) {
    %c0_i32 = arith.constant 0 : i32
    %c0_i32_0 = arith.constant 0 : i32
    %c0_i32_1 = arith.constant 0 : i32
    return %arg0, %c0_i32, %c0_i32_0 : i32, i32, i32
  }
  func.func @transform_1(%arg0: i32) -> (i32, i32) {
    %c0_i32 = arith.constant 0 : i32
    %c0_i32_0 = arith.constant 0 : i32
    %c0_i32_1 = arith.constant 0 : i32
    return %c0_i32, %c0_i32_0 : i32, i32
  }
  func.func @transform_2(%arg0: i32) -> (i32, i32) {
    %c0_i32 = arith.constant 0 : i32
    %c0_i32_0 = arith.constant 0 : i32
    %c0_i32_1 = arith.constant 0 : i32
    return %c0_i32, %c0_i32_0 : i32, i32
  }
  func.func @transform_3(%arg0: i32) -> (i32, i32) {
    %c0_i32 = arith.constant 0 : i32
    %c0_i32_0 = arith.constant 0 : i32
    %c0_i32_1 = arith.constant 0 : i32
    return %c0_i32, %c0_i32_0 : i32, i32
  }
  func.func @transform_4(%arg0: i32) -> (i32, i32, i32) {
    %c0_i32 = arith.constant 0 : i32
    %c0_i32_0 = arith.constant 0 : i32
    %c0_i32_1 = arith.constant 0 : i32
    return %arg0, %c0_i32, %c0_i32_0 : i32, i32, i32
  }
}

</mosaic_0001>

<llo_original>
// kernel: tpu_custom_call.1
$region0: #{tpu_custom_call.1}
  #allocation0 [shape = 'u32[]', space=smem, size = 0x4, offset = 0x4, fixed_abs, tag = 'smem constant byte address 0x4 - core index']
  #allocation1 [shape = 'u32[144,128]{1,0:T(1,128)}', space=vmem, size = 0x12000, scoped, tag = 'internal scratch']
  %s0 = inlined_call_operand.vmem [shape: f32[2,8,32], index: 0, kind: input, shape index: {}]
  %s1 = inlined_call_operand.vmem [shape: bf16[32,128], index: 1, kind: input, shape index: {}]
  %s2 = inlined_call_operand.vmem [shape: bf16[96,64], index: 2, kind: input, shape index: {}]
  %s3 = inlined_call_operand.vmem [shape: f32[8,128], index: 3, kind: input, shape index: {}]
  %s4 = inlined_call_operand.hbm [shape: f32[2,8,32], index: 4, kind: output, shape index: {}]
  %s5 = sld [smem:[#allocation0]]
  $region49: #{tpu_custom_call.1} parent=0
    _
  %s7 = ssub.s32 1, %s5
  %s8 = scalar_select 0, %s7, %s5
  $region1: #{tpu_custom_call.1} parent=0
    #allocation2 [shape = 'u8[8192]{0}', space=vmem, size = 0x2000, scoped, tag = 'output window, operand 0']
    #allocation3 [shape = 's32[2]{0}', space=sflag, size = 0x8, scoped, tag = 'scoped memory for tpu_custom_call.1']
    %9 = vsyncpa [#allocation3], 0
    %s10 = scalar_lea.sflag [#allocation3], 1
    %11 = vsyncpa %s10, 0
    loop: start=0, step=1, limit=4
    $region2: #{tpu_custom_call.1} parent=1 // loop_pre_header
      _
    $region3: #{tpu_custom_call.1} parent=1 // loop_header
      %s13 = sphi 0, %s17
      %p14 = scmp.ge.s32.totalorder %s13, 4
      %s23 = sphi 0, %s25
      %s26 = sphi 0, %s23
      %s27 = sphi 0, %s26
      %s43 = sphi 0, %s27
      %s47 = sphi 0, %s47
      %s49 = sphi 0, %s47
      %s50 = sphi 0, %s49
      %s64 = sphi 0, %s50
      %s68 = sphi 0, %s68
      %s70 = sphi 0, %s68
      %s71 = sphi 0, %s70
      %s85 = sphi 0, %s71
      %s89 = sphi 0, %s89
      %s91 = sphi 0, %s89
      %s92 = sphi 0, %s91
      %s106 = sphi 0, %s92
      %s112 = sphi 0, %s114
      %s115 = sphi 0, %s112
      %s116 = sphi 0, %s115
      %s132 = sphi 0, %s116
    $region4: #{tpu_custom_call.1} parent=1 // loop_header_branch
      %16 = sbr.rel (%p14) target = $region8
    $region5: #{tpu_custom_call.1} parent=1 // loop_body
      %s18 = ssub.s32 %s13, 1
      %s19 = ssub.s32 %s13, 2
      %s20 = sadd.s32 %s13, 1
      %s21 = ssub.s32 %s13, %s20
      %p22 = scmp.eq.s32.totalorder %s21, 0
      %s24 = sadd.s32 %s23, 1
      %s25 = scalar_select %p22, %s23, %s24
      %p28 = pneg %p22
      %p29 = scmp.eq.s32.totalorder %s13, 1
      %p30 = por %p28, %p29
      %p31 = scmp.ne.s32.totalorder %s23, %s26
      %p32 = scmp.eq.s32.totalorder %s13, 0
      %p33 = por %p31, %p32
      %p34 = scmp.ne.s32.totalorder %s23, %s26
      %p35 = scmp.eq.s32.totalorder %s18, 1
      %p36 = por %p34, %p35
      %p37 = scmp.ne.s32.totalorder %s26, %s27
      %p38 = scmp.eq.s32.totalorder %s18, 0
      %p39 = por %p37, %p38
      %p40 = scmp.ne.s32.totalorder %s26, %s27
      %p41 = scmp.eq.s32.totalorder %s19, 1
      %p42 = por %p40, %p41
      %p44 = scmp.ne.s32.totalorder %s27, %s43
      %p45 = scmp.eq.s32.totalorder %s19, 0
      %p46 = por %p44, %p45
      %s48 = sadd.s32 %s47, 1
      %p51 = scmp.eq.s32.totalorder %s13, 1
      %p52 = scmp.ne.s32.totalorder %s47, %s49
      %p53 = scmp.eq.s32.totalorder %s13, 0
      %p54 = por %p52, %p53
      %p55 = scmp.ne.s32.totalorder %s47, %s49
      %p56 = scmp.eq.s32.totalorder %s18, 1
      %p57 = por %p55, %p56
      %p58 = scmp.ne.s32.totalorder %s49, %s50
      %p59 = scmp.eq.s32.totalorder %s18, 0
      %p60 = por %p58, %p59
      %p61 = scmp.ne.s32.totalorder %s49, %s50
      %p62 = scmp.eq.s32.totalorder %s19, 1
      %p63 = por %p61, %p62
      %p65 = scmp.ne.s32.totalorder %s50, %s64
      %p66 = scmp.eq.s32.totalorder %s19, 0
      %p67 = por %p65, %p66
      %s69 = sadd.s32 %s68, 1
      %p72 = scmp.eq.s32.totalorder %s13, 1
      %p73 = scmp.ne.s32.totalorder %s68, %s70
      %p74 = scmp.eq.s32.totalorder %s13, 0
      %p75 = por %p73, %p74
      %p76 = scmp.ne.s32.totalorder %s68, %s70
      %p77 = scmp.eq.s32.totalorder %s18, 1
      %p78 = por %p76, %p77
      %p79 = scmp.ne.s32.totalorder %s70, %s71
      %p80 = scmp.eq.s32.totalorder %s18, 0
      %p81 = por %p79, %p80
      %p82 = scmp.ne.s32.totalorder %s70, %s71
      %p83 = scmp.eq.s32.totalorder %s19, 1
      %p84 = por %p82, %p83
      %p86 = scmp.ne.s32.totalorder %s71, %s85
      %p87 = scmp.eq.s32.totalorder %s19, 0
      %p88 = por %p86, %p87
      %s90 = sadd.s32 %s89, 1
      %p93 = scmp.eq.s32.totalorder %s13, 1
      %p94 = scmp.ne.s32.totalorder %s89, %s91
      %p95 = scmp.eq.s32.totalorder %s13, 0
      %p96 = por %p94, %p95
      %p97 = scmp.ne.s32.totalorder %s89, %s91
      %p98 = scmp.eq.s32.totalorder %s18, 1
      %p99 = por %p97, %p98
      %p100 = scmp.ne.s32.totalorder %s91, %s92
      %p101 = scmp.eq.s32.totalorder %s18, 0
      %p102 = por %p100, %p101
      %p103 = scmp.ne.s32.totalorder %s91, %s92
      %p104 = scmp.eq.s32.totalorder %s19, 1
      %p105 = por %p103, %p104
      %p107 = scmp.ne.s32.totalorder %s92, %s106
      %p108 = scmp.eq.s32.totalorder %s19, 0
      %p109 = por %p107, %p108
      %s110 = ssub.s32 %s13, %s20
      %p111 = scmp.eq.s32.totalorder %s110, 0
      %s113 = sadd.s32 %s112, 1
      %s114 = scalar_select %p111, %s112, %s113
      %p117 = pneg %p111
      %p118 = scmp.eq.s32.totalorder %s13, 1
      %p119 = por %p117, %p118
      %p120 = scmp.ne.s32.totalorder %s112, %s115
      %p121 = scmp.eq.s32.totalorder %s13, 0
      %p122 = por %p120, %p121
      %p123 = scmp.ne.s32.totalorder %s112, %s115
      %p124 = scmp.eq.s32.totalorder %s18, 1
      %p125 = por %p123, %p124
      %p126 = scmp.ne.s32.totalorder %s115, %s116
      %p127 = scmp.eq.s32.totalorder %s18, 0
      %p128 = por %p126, %p127
      %p129 = scmp.ne.s32.totalorder %s115, %s116
      %p130 = scmp.eq.s32.totalorder %s19, 1
      %p131 = por %p129, %p130
      %p133 = scmp.ne.s32.totalorder %s116, %s132
      %p134 = scmp.eq.s32.totalorder %s19, 0
      %p135 = por %p133, %p134
      %p136 = scmp.le.s32.totalorder 1, %s13
      %p137 = scmp.lt.s32.totalorder %s13, 3
      %p138 = pnand %p136, %p137
      %p139 = pneg %p138
      // Predicated region
      $region9: #{tpu_custom_call.1} parent=5 // pred_check
        _
      $region10: #{tpu_custom_call.1} parent=5 // pred_check_branch
        %141 = sbr.rel (%p138) target = $region12
      $region11: #{tpu_custom_call.1} parent=5 // pred_region
        %s142 = ssub.s32 %s13, 1
        // Predicated region
        $region13: #{tpu_custom_call.1} parent=11 // pred_check
          %p143 = pneg %p60
        $region14: #{tpu_custom_call.1} parent=11 // pred_check_branch
          %145 = sbr.rel (%p143) target = $region16
        $region15: #{tpu_custom_call.1} parent=11 // pred_region
          _
        $region16: #{tpu_custom_call.1} parent=11 // pred_fallthru
          _
        // Predicated region
        $region17: #{tpu_custom_call.1} parent=11 // pred_check
          %p146 = pneg %p81
        $region18: #{tpu_custom_call.1} parent=11 // pred_check_branch
          %148 = sbr.rel (%p146) target = $region20
        $region19: #{tpu_custom_call.1} parent=11 // pred_region
          _
        $region20: #{tpu_custom_call.1} parent=11 // pred_fallthru
          _
        // Predicated region
        $region21: #{tpu_custom_call.1} parent=11 // pred_check
          %p149 = pneg %p102
        $region22: #{tpu_custom_call.1} parent=11 // pred_check_branch
          %151 = sbr.rel (%p149) target = $region24
        $region23: #{tpu_custom_call.1} parent=11 // pred_region
          _
        $region24: #{tpu_custom_call.1} parent=11 // pred_fallthru
          _
      $region12: #{tpu_custom_call.1} parent=5 // pred_fallthru
        _
      %p152 = scmp.lt.s32.totalorder %s13, 2
      // Predicated region
      $region25: #{tpu_custom_call.1} parent=5 // pred_check
        %p153 = pneg %p152
      $region26: #{tpu_custom_call.1} parent=5 // pred_check_branch
        %155 = sbr.rel (%p153) target = $region28
      $region27: #{tpu_custom_call.1} parent=5 // pred_region
        // Predicated region
        $region29: #{tpu_custom_call.1} parent=27 // pred_check
          %p156 = pneg %p33
        $region30: #{tpu_custom_call.1} parent=27 // pred_check_branch
          %158 = sbr.rel (%p156) target = $region32
        $region31: #{tpu_custom_call.1} parent=27 // pred_region
          %p159 = scmp.lt.s32.totalorder %s13, 1
          %s160 = scalar_select %p159, %s13, 1
          %s161 = smul.addr %s160, 8
          %s162 = scalar_lea.vmem %s0, %s161
        $region32: #{tpu_custom_call.1} parent=27 // pred_fallthru
          _
      $region28: #{tpu_custom_call.1} parent=5 // pred_fallthru
        _
      %p163 = scmp.le.s32.totalorder 1, %s13
      %p164 = scmp.lt.s32.totalorder %s13, 3
      %p165 = pnand %p163, %p164
      %p166 = pneg %p165
      // Predicated region
      $region33: #{tpu_custom_call.1} parent=5 // pred_check
        _
      $region34: #{tpu_custom_call.1} parent=5 // pred_check_branch
        %168 = sbr.rel (%p165) target = $region36
      $region35: #{tpu_custom_call.1} parent=5 // pred_region
        %s169 = ssub.s32 %s13, 1
        %p170 = scmp.lt.s32.totalorder %s18, 1
        %s171 = scalar_select %p170, %s18, 1
        %s172 = smul.addr %s171, 8
        %s173 = scalar_lea.vmem %s0, %s172
        %p174 = pneg %p39
        %p175 = pneg %p36
        %p176 = pneg %p60
        %p177 = pneg %p57
        %p178 = pneg %p81
        %p179 = pneg %p78
        %p180 = pneg %p102
        %p181 = pneg %p99
        %p182 = pneg %p128
        %p183 = pneg %p125
        %s184 = sand.u32 %s115, 1
        %s185 = scalar_lea.sflag [#allocation3], %s184
        %s186 = sand.u32 %s115, 1
        %s187 = smul.addr %s186, 8
        %s188 = scalar_lea.vmem [#allocation2], %s187
        %p189 = scmp.lt.s32.totalorder %s18, 1
        %s190 = scalar_select %p189, %s18, 1
        %s191 = smul.addr %s190, 8
        %s192 = scalar_lea.vmem %s0, %s191
        %v194 = vld [vmem:[%s192] sm:$0xff]
        %v195 = vld [vmem:[%s3] sm:$0xff]
        %v196 = vld [vmem:[%s1] sm:$0xf]
        %v197 = vld [vmem:[%s1 + $0x4] sm:$0xf]
        %v198 = vld [vmem:[%s1 + $0x8] sm:$0xf]
        %v199 = vld [vmem:[%s1 + $0xc] sm:$0xf]
        %v200 = vpack.c.bf16 %v194, %v194
        %v201 = vlaneseq
        %v202 = vshrl.u32 %v201, 7
        %v203 = vsub.s32 0, %v202
        %v204 = vrot.slane %v195, %v203
        %v209 = vunpack.c.l.b16 %v196
        %v210 = vunpack.c.l.b16 %v197
        %v211 = vunpack.c.l.b16 %v198
        %v212 = vunpack.c.l.b16 %v199
        %v213 = vpack.c.b16 %v210, %v209
        %v214 = vpack.c.b16 %v212, %v211
        %vm217 = vcmask 261120
        %v219 = vsel %vm217, %v200, 0
        %221 = vmatprep.subr.bf16.mxu0 0
        %222 = vmatpush1.bf16.msra.mxu0 %v213
        %223 = vmatprep.subr.bf16.mxu0 0
        %224 = vmatpush1.bf16.msra.mxu0 %v214
        %225 = vmatprep.subr.bf16.mxu0 0
        %226 = vmatpush1.bf16.msra.mxu0 0
        %227 = vmatprep.subr.bf16.mxu0 0
        %228 = vmatpush1.bf16.msra.mxu0 0
        %229 = vmatprep.subr.bf16.mxu0 0
        %230 = vmatpush1.bf16.msra.mxu0 0
        %231 = vmatprep.subr.bf16.mxu0 0
        %232 = vmatpush1.bf16.msra.mxu0 0
        %233 = vmatprep.subr.bf16.mxu0 0
        %234 = vmatpush1.bf16.msra.mxu0 0
        %235 = vmatprep.subr.bf16.mxu0 0
        %236 = vmatpush1.bf16.msra.mxu0 0
        %237 = vmatprep.subr.bf16.mxu0 0
        %238 = vmatpush1.bf16.msra.mxu0 0
        %239 = vmatprep.subr.bf16.mxu0 0
        %240 = vmatpush1.bf16.msra.mxu0 0
        %241 = vmatprep.subr.bf16.mxu0 0
        %242 = vmatpush1.bf16.msra.mxu0 0
        %243 = vmatprep.subr.bf16.mxu0 0
        %244 = vmatpush1.bf16.msra.mxu0 0
        %245 = vmatprep.subr.bf16.mxu0 0
        %246 = vmatpush1.bf16.msra.mxu0 0
        %247 = vmatprep.subr.bf16.mxu0 0
        %248 = vmatpush1.bf16.msra.mxu0 0
        %249 = vmatprep.subr.bf16.mxu0 0
        %250 = vmatpush1.bf16.msra.mxu0 0
        %251 = vmatprep.subr.bf16.mxu0 0
        %252 = vmatpush1.bf16.msra.mxu0 0
        %253 = vmatprep.mubr.bf16.mxu0 0
        %254 = vmatmul.mubr.bf16.gmra.mrb[0].mxu0 %v219
        %v255 = vpop.f32.mrb[0].mxu0
        %v256 = vadd.f32 %v204, %v255
        %v257 = vpop.f32.mrb[0].mxu0
        %v258 = vpop.f32.mrb[0].mxu0
        %v259 = vpop.f32.mrb[0].mxu0
        %260 = vdwg.mxu0
        %262 = vrot.lane.b32.xlu0 %v256, 120
        %v263 = vpop.permute.xlu0 %262
        %265 = vrot.lane.b32.xlu0 %v256, 112
        %v266 = vpop.permute.xlu0 %265
        %268 = vrot.lane.b32.xlu0 %v256, 104
        %v269 = vpop.permute.xlu0 %268
        %v271 = vpack.c.bf16 %v256, %v256
        %v272 = vpack.c.bf16 %v263, %v263
        %v273 = vpack.c.bf16 %v266, %v266
        %v274 = vpack.c.bf16 %v269, %v269
        %276 = vrot.lane.b32.xlu0 %v271, 96
        %v277 = vpop.permute.xlu0 %276
        %vm278 = vcmask 64512
        %v280 = vsel %vm278, %v271, 0
        %v283 = vsel %vm278, %v277, 0
        %285 = vmatprep.subr.bf16.mxu0 0
        %286 = vmatpush1.bf16.xpose.msra.mxu0 %v283
        %287 = vmatprep.subr.bf16.mxu0 0
        %288 = vmatpush1.bf16.xpose.msra.mxu0 0
        %289 = vmatprep.subr.bf16.mxu0 0
        %290 = vmatpush1.bf16.xpose.msra.mxu0 0
        %291 = vmatprep.subr.bf16.mxu0 0
        %292 = vmatpush1.bf16.xpose.msra.mxu0 0
        %293 = vmatprep.subr.bf16.mxu0 0
        %294 = vmatpush1.bf16.xpose.msra.mxu0 0
        %295 = vmatprep.subr.bf16.mxu0 0
        %296 = vmatpush1.bf16.xpose.msra.mxu0 0
        %297 = vmatprep.subr.bf16.mxu0 0
        %298 = vmatpush1.bf16.xpose.msra.mxu0 0
        %299 = vmatprep.subr.bf16.mxu0 0
        %300 = vmatpush1.bf16.xpose.msra.mxu0 0
        %301 = vmatprep.subr.bf16.mxu0 0
        %302 = vmatpush1.bf16.xpose.msra.mxu0 0
        %303 = vmatprep.subr.bf16.mxu0 0
        %304 = vmatpush1.bf16.xpose.msra.mxu0 0
        %305 = vmatprep.subr.bf16.mxu0 0
        %306 = vmatpush1.bf16.xpose.msra.mxu0 0
        %307 = vmatprep.subr.bf16.mxu0 0
        %308 = vmatpush1.bf16.xpose.msra.mxu0 0
        %309 = vmatprep.subr.bf16.mxu0 0
        %310 = vmatpush1.bf16.xpose.msra.mxu0 0
        %311 = vmatprep.subr.bf16.mxu0 0
        %312 = vmatpush1.bf16.xpose.msra.mxu0 0
        %313 = vmatprep.subr.bf16.mxu0 0
        %314 = vmatpush1.bf16.xpose.msra.mxu0 0
        %315 = vmatprep.subr.bf16.mxu0 0
        %316 = vmatpush1.bf16.xpose.msra.mxu0 0
        %317 = vmatprep.mubr.bf16.mxu0 0
        %318 = vmatmul.mubr.bf16.gmra.mrb[0].mxu0 %v280
        %v319 = vpop.f32.mrb[0].mxu0
        %v320 = vadd.f32 0.0, %v319
        %v321 = vpop.f32.mrb[0].mxu0
        %v322 = vpop.f32.mrb[0].mxu0
        %v323 = vpop.f32.mrb[0].mxu0
        %324 = vdwg.mxu0
        %326 = vrot.lane.b32.xlu0 %v272, 96
        %v327 = vpop.permute.xlu0 %326
        %v329 = vsel %vm278, %v272, 0
        %v332 = vsel %vm278, %v327, 0
        %334 = vmatprep.subr.bf16.mxu0 0
        %335 = vmatpush1.bf16.xpose.msra.mxu0 %v332
        %336 = vmatprep.subr.bf16.mxu0 0
        %337 = vmatpush1.bf16.xpose.msra.mxu0 0
        %338 = vmatprep.subr.bf16.mxu0 0
        %339 = vmatpush1.bf16.xpose.msra.mxu0 0
        %340 = vmatprep.subr.bf16.mxu0 0
        %341 = vmatpush1.bf16.xpose.msra.mxu0 0
        %342 = vmatprep.subr.bf16.mxu0 0
        %343 = vmatpush1.bf16.xpose.msra.mxu0 0
        %344 = vmatprep.subr.bf16.mxu0 0
        %345 = vmatpush1.bf16.xpose.msra.mxu0 0
        %346 = vmatprep.subr.bf16.mxu0 0
        %347 = vmatpush1.bf16.xpose.msra.mxu0 0
        %348 = vmatprep.subr.bf16.mxu0 0
        %349 = vmatpush1.bf16.xpose.msra.mxu0 0
        %350 = vmatprep.subr.bf16.mxu0 0
        %351 = vmatpush1.bf16.xpose.msra.mxu0 0
        %352 = vmatprep.subr.bf16.mxu0 0
        %353 = vmatpush1.bf16.xpose.msra.mxu0 0
        %354 = vmatprep.subr.bf16.mxu0 0
        %355 = vmatpush1.bf16.xpose.msra.mxu0 0
        %356 = vmatprep.subr.bf16.mxu0 0
        %357 = vmatpush1.bf16.xpose.msra.mxu0 0
        %358 = vmatprep.subr.bf16.mxu0 0
        %359 = vmatpush1.bf16.xpose.msra.mxu0 0
        %360 = vmatprep.subr.bf16.mxu0 0
        %361 = vmatpush1.bf16.xpose.msra.mxu0 0
        %362 = vmatprep.subr.bf16.mxu0 0
        %363 = vmatpush1.bf16.xpose.msra.mxu0 0
        %364 = vmatprep.subr.bf16.mxu0 0
        %365 = vmatpush1.bf16.xpose.msra.mxu0 0
        %366 = vmatprep.mubr.bf16.mxu0 0
        %367 = vmatmul.mubr.bf16.gmra.mrb[0].mxu0 %v329
        %v368 = vpop.f32.mrb[0].mxu0
        %v369 = vadd.f32 0.0, %v368
        %v370 = vpop.f32.mrb[0].mxu0
        %v371 = vpop.f32.mrb[0].mxu0
        %v372 = vpop.f32.mrb[0].mxu0
        %373 = vdwg.mxu0
        %375 = vrot.lane.b32.xlu0 %v273, 96
        %v376 = vpop.permute.xlu0 %375
        %v378 = vsel %vm278, %v273, 0
        %v381 = vsel %vm278, %v376, 0
        %383 = vmatprep.subr.bf16.mxu0 0
        %384 = vmatpush1.bf16.xpose.msra.mxu0 %v381
        %385 = vmatprep.subr.bf16.mxu0 0
        %386 = vmatpush1.bf16.xpose.msra.mxu0 0
        %387 = vmatprep.subr.bf16.mxu0 0
        %388 = vmatpush1.bf16.xpose.msra.mxu0 0
        %389 = vmatprep.subr.bf16.mxu0 0
        %390 = vmatpush1.bf16.xpose.msra.mxu0 0
        %391 = vmatprep.subr.bf16.mxu0 0
        %392 = vmatpush1.bf16.xpose.msra.mxu0 0
        %393 = vmatprep.subr.bf16.mxu0 0
        %394 = vmatpush1.bf16.xpose.msra.mxu0 0
        %395 = vmatprep.subr.bf16.mxu0 0
        %396 = vmatpush1.bf16.xpose.msra.mxu0 0
        %397 = vmatprep.subr.bf16.mxu0 0
        %398 = vmatpush1.bf16.xpose.msra.mxu0 0
        %399 = vmatprep.subr.bf16.mxu0 0
        %400 = vmatpush1.bf16.xpose.msra.mxu0 0
        %401 = vmatprep.subr.bf16.mxu0 0
        %402 = vmatpush1.bf16.xpose.msra.mxu0 0
        %403 = vmatprep.subr.bf16.mxu0 0
        %404 = vmatpush1.bf16.xpose.msra.mxu0 0
        %405 = vmatprep.subr.bf16.mxu0 0
        %406 = vmatpush1.bf16.xpose.msra.mxu0 0
        %407 = vmatprep.subr.bf16.mxu0 0
        %408 = vmatpush1.bf16.xpose.msra.mxu0 0
        %409 = vmatprep.subr.bf16.mxu0 0
        %410 = vmatpush1.bf16.xpose.msra.mxu0 0
        %411 = vmatprep.subr.bf16.mxu0 0
        %412 = vmatpush1.bf16.xpose.msra.mxu0 0
        %413 = vmatprep.subr.bf16.mxu0 0
        %414 = vmatpush1.bf16.xpose.msra.mxu0 0
        %415 = vmatprep.mubr.bf16.mxu0 0
        %416 = vmatmul.mubr.bf16.gmra.mrb[0].mxu0 %v378
        %v417 = vpop.f32.mrb[0].mxu0
        %v418 = vadd.f32 0.0, %v417
        %v419 = vpop.f32.mrb[0].mxu0
        %v420 = vpop.f32.mrb[0].mxu0
        %v421 = vpop.f32.mrb[0].mxu0
        %422 = vdwg.mxu0
        %424 = vrot.lane.b32.xlu0 %v274, 96
        %v425 = vpop.permute.xlu0 %424
        %v427 = vsel %vm278, %v274, 0
        %v430 = vsel %vm278, %v425, 0
        %432 = vmatprep.subr.bf16.mxu0 0
        %433 = vmatpush1.bf16.xpose.msra.mxu0 %v430
        %434 = vmatprep.subr.bf16.mxu0 0
        %435 = vmatpush1.bf16.xpose.msra.mxu0 0
        %436 = vmatprep.subr.bf16.mxu0 0
        %437 = vmatpush1.bf16.xpose.msra.mxu0 0
        %438 = vmatprep.subr.bf16.mxu0 0
        %439 = vmatpush1.bf16.xpose.msra.mxu0 0
        %440 = vmatprep.subr.bf16.mxu0 0
        %441 = vmatpush1.bf16.xpose.msra.mxu0 0
        %442 = vmatprep.subr.bf16.mxu0 0
        %443 = vmatpush1.bf16.xpose.msra.mxu0 0
        %444 = vmatprep.subr.bf16.mxu0 0
        %445 = vmatpush1.bf16.xpose.msra.mxu0 0
        %446 = vmatprep.subr.bf16.mxu0 0
        %447 = vmatpush1.bf16.xpose.msra.mxu0 0
        %448 = vmatprep.subr.bf16.mxu0 0
        %449 = vmatpush1.bf16.xpose.msra.mxu0 0
        %450 = vmatprep.subr.bf16.mxu0 0
        %451 = vmatpush1.bf16.xpose.msra.mxu0 0
        %452 = vmatprep.subr.bf16.mxu0 0
        %453 = vmatpush1.bf16.xpose.msra.mxu0 0
        %454 = vmatprep.subr.bf16.mxu0 0
        %455 = vmatpush1.bf16.xpose.msra.mxu0 0
        %456 = vmatprep.subr.bf16.mxu0 0
        %457 = vmatpush1.bf16.xpose.msra.mxu0 0
        %458 = vmatprep.subr.bf16.mxu0 0
        %459 = vmatpush1.bf16.xpose.msra.mxu0 0
        %460 = vmatprep.subr.bf16.mxu0 0
        %461 = vmatpush1.bf16.xpose.msra.mxu0 0
        %462 = vmatprep.subr.bf16.mxu0 0
        %463 = vmatpush1.bf16.xpose.msra.mxu0 0
        %464 = vmatprep.mubr.bf16.mxu0 0
        %465 = vmatmul.mubr.bf16.gmra.mrb[0].mxu0 %v427
        %v466 = vpop.f32.mrb[0].mxu0
        %v467 = vadd.f32 0.0, %v466
        %v468 = vpop.f32.mrb[0].mxu0
        %v469 = vpop.f32.mrb[0].mxu0
        %v470 = vpop.f32.mrb[0].mxu0
        %471 = vdwg.mxu0
        %v472 = vsel %vm278, %v320, -inf
        %473 = vmax.xlane.f32.xlu0 %v472
        %v474 = vpop.xlane.xlu0 %473
        %v475 = vsel %vm278, %v369, -inf
        %476 = vmax.xlane.f32.xlu0 %v475
        %v477 = vpop.xlane.xlu0 %476
        %v478 = vsel %vm278, %v418, -inf
        %479 = vmax.xlane.f32.xlu0 %v478
        %v480 = vpop.xlane.xlu0 %479
        %v481 = vsel %vm278, %v467, -inf
        %482 = vmax.xlane.f32.xlu0 %v481
        %v483 = vpop.xlane.xlu0 %482
        %v484 = vsub.f32 %v320, %v474
        %v485 = vsub.f32 %v369, %v477
        %v486 = vsub.f32 %v418, %v480
        %v487 = vsub.f32 %v467, %v483
        %v488 = vmul.f32 %v484, 1.442695
        %v489 = vpow.pop %v488
        %v490 = vmul.f32 %v485, 1.442695
        %v491 = vpow.pop %v490
        %v492 = vmul.f32 %v486, 1.442695
        %v493 = vpow.pop %v492
        %v494 = vmul.f32 %v487, 1.442695
        %v495 = vpow.pop %v494
        %v496 = vsel %vm278, %v489, 0.0
        %497 = vadd.xlane.f32.xlu0 %v496
        %v498 = vpop.xlane.xlu0 %497
        %v499 = vsel %vm278, %v491, 0.0
        %500 = vadd.xlane.f32.xlu0 %v499
        %v501 = vpop.xlane.xlu0 %500
        %v502 = vsel %vm278, %v493, 0.0
        %503 = vadd.xlane.f32.xlu0 %v502
        %v504 = vpop.xlane.xlu0 %503
        %v505 = vsel %vm278, %v495, 0.0
        %506 = vadd.xlane.f32.xlu0 %v505
        %v507 = vpop.xlane.xlu0 %506
        %v508 = vpack.c.bf16 %v489, %v489
        %v509 = vpack.c.bf16 %v491, %v491
        %v510 = vpack.c.bf16 %v493, %v493
        %v511 = vpack.c.bf16 %v495, %v495
        %512 = vrot.lane.b32.xlu0 %v271, 64
        %v513 = vpop.permute.xlu0 %512
        %v515 = vsel %vm278, %v508, 0
        %vm517 = vcmask 1043456
        %v519 = vsel %vm517, %v513, 0
        %521 = vmatprep.subr.bf16.mxu0 0
        %522 = vmatpush1.bf16.msra.mxu0 %v519
        %523 = vmatprep.subr.bf16.mxu0 0
        %524 = vmatpush1.bf16.msra.mxu0 0
        %525 = vmatprep.subr.bf16.mxu0 0
        %526 = vmatpush1.bf16.msra.mxu0 0
        %527 = vmatprep.subr.bf16.mxu0 0
        %528 = vmatpush1.bf16.msra.mxu0 0
        %529 = vmatprep.subr.bf16.mxu0 0
        %530 = vmatpush1.bf16.msra.mxu0 0
        %531 = vmatprep.subr.bf16.mxu0 0
        %532 = vmatpush1.bf16.msra.mxu0 0
        %533 = vmatprep.subr.bf16.mxu0 0
        %534 = vmatpush1.bf16.msra.mxu0 0
        %535 = vmatprep.subr.bf16.mxu0 0
        %536 = vmatpush1.bf16.msra.mxu0 0
        %537 = vmatprep.subr.bf16.mxu0 0
        %538 = vmatpush1.bf16.msra.mxu0 0
        %539 = vmatprep.subr.bf16.mxu0 0
        %540 = vmatpush1.bf16.msra.mxu0 0
        %541 = vmatprep.subr.bf16.mxu0 0
        %542 = vmatpush1.bf16.msra.mxu0 0
        %543 = vmatprep.subr.bf16.mxu0 0
        %544 = vmatpush1.bf16.msra.mxu0 0
        %545 = vmatprep.subr.bf16.mxu0 0
        %546 = vmatpush1.bf16.msra.mxu0 0
        %547 = vmatprep.subr.bf16.mxu0 0
        %548 = vmatpush1.bf16.msra.mxu0 0
        %549 = vmatprep.subr.bf16.mxu0 0
        %550 = vmatpush1.bf16.msra.mxu0 0
        %551 = vmatprep.subr.bf16.mxu0 0
        %552 = vmatpush1.bf16.msra.mxu0 0
        %553 = vmatprep.mubr.bf16.mxu0 0
        %554 = vmatmul.mubr.bf16.gmra.mrb[0].mxu0 %v515
        %v555 = vpop.f32.mrb[0].mxu0
        %v556 = vadd.f32 0.0, %v555
        %v557 = vpop.f32.mrb[0].mxu0
        %v558 = vpop.f32.mrb[0].mxu0
        %v559 = vpop.f32.mrb[0].mxu0
        %560 = vdwg.mxu0
        %561 = vrot.lane.b32.xlu0 %v272, 64
        %v562 = vpop.permute.xlu0 %561
        %v564 = vsel %vm278, %v509, 0
        %v567 = vsel %vm517, %v562, 0
        %569 = vmatprep.subr.bf16.mxu0 0
        %570 = vmatpush1.bf16.msra.mxu0 %v567
        %571 = vmatprep.subr.bf16.mxu0 0
        %572 = vmatpush1.bf16.msra.mxu0 0
        %573 = vmatprep.subr.bf16.mxu0 0
        %574 = vmatpush1.bf16.msra.mxu0 0
        %575 = vmatprep.subr.bf16.mxu0 0
        %576 = vmatpush1.bf16.msra.mxu0 0
        %577 = vmatprep.subr.bf16.mxu0 0
        %578 = vmatpush1.bf16.msra.mxu0 0
        %579 = vmatprep.subr.bf16.mxu0 0
        %580 = vmatpush1.bf16.msra.mxu0 0
        %581 = vmatprep.subr.bf16.mxu0 0
        %582 = vmatpush1.bf16.msra.mxu0 0
        %583 = vmatprep.subr.bf16.mxu0 0
        %584 = vmatpush1.bf16.msra.mxu0 0
        %585 = vmatprep.subr.bf16.mxu0 0
        %586 = vmatpush1.bf16.msra.mxu0 0
        %587 = vmatprep.subr.bf16.mxu0 0
        %588 = vmatpush1.bf16.msra.mxu0 0
        %589 = vmatprep.subr.bf16.mxu0 0
        %590 = vmatpush1.bf16.msra.mxu0 0
        %591 = vmatprep.subr.bf16.mxu0 0
        %592 = vmatpush1.bf16.msra.mxu0 0
        %593 = vmatprep.subr.bf16.mxu0 0
        %594 = vmatpush1.bf16.msra.mxu0 0
        %595 = vmatprep.subr.bf16.mxu0 0
        %596 = vmatpush1.bf16.msra.mxu0 0
        %597 = vmatprep.subr.bf16.mxu0 0
        %598 = vmatpush1.bf16.msra.mxu0 0
        %599 = vmatprep.subr.bf16.mxu0 0
        %600 = vmatpush1.bf16.msra.mxu0 0
        %601 = vmatprep.mubr.bf16.mxu0 0
        %602 = vmatmul.mubr.bf16.gmra.mrb[0].mxu0 %v564
        %v603 = vpop.f32.mrb[0].mxu0
        %v604 = vadd.f32 0.0, %v603
        %v605 = vpop.f32.mrb[0].mxu0
        %v606 = vpop.f32.mrb[0].mxu0
        %v607 = vpop.f32.mrb[0].mxu0
        %608 = vdwg.mxu0
        %609 = vrot.lane.b32.xlu0 %v273, 64
        %v610 = vpop.permute.xlu0 %609
        %v612 = vsel %vm278, %v510, 0
        %v615 = vsel %vm517, %v610, 0
        %617 = vmatprep.subr.bf16.mxu0 0
        %618 = vmatpush1.bf16.msra.mxu0 %v615
        %619 = vmatprep.subr.bf16.mxu0 0
        %620 = vmatpush1.bf16.msra.mxu0 0
        %621 = vmatprep.subr.bf16.mxu0 0
        %622 = vmatpush1.bf16.msra.mxu0 0
        %623 = vmatprep.subr.bf16.mxu0 0
        %624 = vmatpush1.bf16.msra.mxu0 0
        %625 = vmatprep.subr.bf16.mxu0 0
        %626 = vmatpush1.bf16.msra.mxu0 0
        %627 = vmatprep.subr.bf16.mxu0 0
        %628 = vmatpush1.bf16.msra.mxu0 0
        %629 = vmatprep.subr.bf16.mxu0 0
        %630 = vmatpush1.bf16.msra.mxu0 0
        %631 = vmatprep.subr.bf16.mxu0 0
        %632 = vmatpush1.bf16.msra.mxu0 0
        %633 = vmatprep.subr.bf16.mxu0 0
        %634 = vmatpush1.bf16.msra.mxu0 0
        %635 = vmatprep.subr.bf16.mxu0 0
        %636 = vmatpush1.bf16.msra.mxu0 0
        %637 = vmatprep.subr.bf16.mxu0 0
        %638 = vmatpush1.bf16.msra.mxu0 0
        %639 = vmatprep.subr.bf16.mxu0 0
        %640 = vmatpush1.bf16.msra.mxu0 0
        %641 = vmatprep.subr.bf16.mxu0 0
        %642 = vmatpush1.bf16.msra.mxu0 0
        %643 = vmatprep.subr.bf16.mxu0 0
        %644 = vmatpush1.bf16.msra.mxu0 0
        %645 = vmatprep.subr.bf16.mxu0 0
        %646 = vmatpush1.bf16.msra.mxu0 0
        %647 = vmatprep.subr.bf16.mxu0 0
        %648 = vmatpush1.bf16.msra.mxu0 0
        %649 = vmatprep.mubr.bf16.mxu0 0
        %650 = vmatmul.mubr.bf16.gmra.mrb[0].mxu0 %v612
        %v651 = vpop.f32.mrb[0].mxu0
        %v652 = vadd.f32 0.0, %v651
        %v653 = vpop.f32.mrb[0].mxu0
        %v654 = vpop.f32.mrb[0].mxu0
        %v655 = vpop.f32.mrb[0].mxu0
        %656 = vdwg.mxu0
        %657 = vrot.lane.b32.xlu0 %v274, 64
        %v658 = vpop.permute.xlu0 %657
        %v660 = vsel %vm278, %v511, 0
        %v663 = vsel %vm517, %v658, 0
        %665 = vmatprep.subr.bf16.mxu0 0
        %666 = vmatpush1.bf16.msra.mxu0 %v663
        %667 = vmatprep.subr.bf16.mxu0 0
        %668 = vmatpush1.bf16.msra.mxu0 0
        %669 = vmatprep.subr.bf16.mxu0 0
        %670 = vmatpush1.bf16.msra.mxu0 0
        %671 = vmatprep.subr.bf16.mxu0 0
        %672 = vmatpush1.bf16.msra.mxu0 0
        %673 = vmatprep.subr.bf16.mxu0 0
        %674 = vmatpush1.bf16.msra.mxu0 0
        %675 = vmatprep.subr.bf16.mxu0 0
        %676 = vmatpush1.bf16.msra.mxu0 0
        %677 = vmatprep.subr.bf16.mxu0 0
        %678 = vmatpush1.bf16.msra.mxu0 0
        %679 = vmatprep.subr.bf16.mxu0 0
        %680 = vmatpush1.bf16.msra.mxu0 0
        %681 = vmatprep.subr.bf16.mxu0 0
        %682 = vmatpush1.bf16.msra.mxu0 0
        %683 = vmatprep.subr.bf16.mxu0 0
        %684 = vmatpush1.bf16.msra.mxu0 0
        %685 = vmatprep.subr.bf16.mxu0 0
        %686 = vmatpush1.bf16.msra.mxu0 0
        %687 = vmatprep.subr.bf16.mxu0 0
        %688 = vmatpush1.bf16.msra.mxu0 0
        %689 = vmatprep.subr.bf16.mxu0 0
        %690 = vmatpush1.bf16.msra.mxu0 0
        %691 = vmatprep.subr.bf16.mxu0 0
        %692 = vmatpush1.bf16.msra.mxu0 0
        %693 = vmatprep.subr.bf16.mxu0 0
        %694 = vmatpush1.bf16.msra.mxu0 0
        %695 = vmatprep.subr.bf16.mxu0 0
        %696 = vmatpush1.bf16.msra.mxu0 0
        %697 = vmatprep.mubr.bf16.mxu0 0
        %698 = vmatmul.mubr.bf16.gmra.mrb[0].mxu0 %v660
        %v699 = vpop.f32.mrb[0].mxu0
        %v700 = vadd.f32 0.0, %v699
        %v701 = vpop.f32.mrb[0].mxu0
        %v702 = vpop.f32.mrb[0].mxu0
        %v703 = vpop.f32.mrb[0].mxu0
        %704 = vdwg.mxu0
        %v705 = vrcp.pop %v498
        %v706 = vrcp.pop %v501
        %v707 = vrcp.pop %v504
        %v708 = vrcp.pop %v507
        %v709 = vmul.f32 %v556, %v705
        %v710 = vmul.f32 %v604, %v706
        %v711 = vmul.f32 %v652, %v707
        %v712 = vmul.f32 %v700, %v708
        %714 = vrot.lane.b32.xlu0 %v710, 8
        %v715 = vpop.permute.xlu0 %714
        %718 = vrot.lane.b32.xlu0 %v711, 16
        %v719 = vpop.permute.xlu0 %718
        %722 = vrot.lane.b32.xlu0 %v712, 24
        %v723 = vpop.permute.xlu0 %722
        %v725 = vsel %vm278, %v709, %v715
        %vm726 = vcmask 130048
        %v727 = vsel %vm726, %v725, %v719
        %vm728 = vcmask 195584
        %v729 = vsel %vm728, %v727, %v723
        %v730 = vpack.c.bf16 %v729, %v729
        %v731 = vlaneseq
        %v732 = vshrl.u32 %v731, 7
        %v733 = vsub.s32 1, %v732
        %v734 = vrot.slane %v195, %v733
        %735 = vrot.lane.b32.xlu0 %v213, 32
        %v736 = vpop.permute.xlu0 %735
        %737 = vrot.lane.b32.xlu0 %v214, 32
        %v738 = vpop.permute.xlu0 %737
        %v742 = vsel %vm217, %v730, 0
        %744 = vmatprep.subr.bf16.mxu0 0
        %745 = vmatpush1.bf16.msra.mxu0 %v736
        %746 = vmatprep.subr.bf16.mxu0 0
        %747 = vmatpush1.bf16.msra.mxu0 %v738
        %748 = vmatprep.subr.bf16.mxu0 0
        %749 = vmatpush1.bf16.msra.mxu0 0
        %750 = vmatprep.subr.bf16.mxu0 0
        %751 = vmatpush1.bf16.msra.mxu0 0
        %752 = vmatprep.subr.bf16.mxu0 0
        %753 = vmatpush1.bf16.msra.mxu0 0
        %754 = vmatprep.subr.bf16.mxu0 0
        %755 = vmatpush1.bf16.msra.mxu0 0
        %756 = vmatprep.subr.bf16.mxu0 0
        %757 = vmatpush1.bf16.msra.mxu0 0
        %758 = vmatprep.subr.bf16.mxu0 0
        %759 = vmatpush1.bf16.msra.mxu0 0
        %760 = vmatprep.subr.bf16.mxu0 0
        %761 = vmatpush1.bf16.msra.mxu0 0
        %762 = vmatprep.subr.bf16.mxu0 0
        %763 = vmatpush1.bf16.msra.mxu0 0
        %764 = vmatprep.subr.bf16.mxu0 0
        %765 = vmatpush1.bf16.msra.mxu0 0
        %766 = vmatprep.subr.bf16.mxu0 0
        %767 = vmatpush1.bf16.msra.mxu0 0
        %768 = vmatprep.subr.bf16.mxu0 0
        %769 = vmatpush1.bf16.msra.mxu0 0
        %770 = vmatprep.subr.bf16.mxu0 0
        %771 = vmatpush1.bf16.msra.mxu0 0
        %772 = vmatprep.subr.bf16.mxu0 0
        %773 = vmatpush1.bf16.msra.mxu0 0
        %774 = vmatprep.subr.bf16.mxu0 0
        %775 = vmatpush1.bf16.msra.mxu0 0
        %776 = vmatprep.mubr.bf16.mxu0 0
        %777 = vmatmul.mubr.bf16.gmra.mrb[0].mxu0 %v742
        %v778 = vpop.f32.mrb[0].mxu0
        %v779 = vadd.f32 %v734, %v778
        %v780 = vpop.f32.mrb[0].mxu0
        %v781 = vpop.f32.mrb[0].mxu0
        %v782 = vpop.f32.mrb[0].mxu0
        %783 = vdwg.mxu0
        %v784 = vadd.f32 %v194, %v779
        %v785 = vsel %vm217, %v784, 0.0
        %786 = vadd.xlane.f32.xlu0 %v785
        %v787 = vpop.xlane.xlu0 %786
        %v788 = vrcp.pop 32.0
        %v789 = vmul.f32 %v787, %v788
        %v790 = vsub.f32 %v784, %v789
        %v791 = vmul.f32 %v790, %v790
        %v792 = vsel %vm217, %v791, 0.0
        %793 = vadd.xlane.f32.xlu0 %v792
        %v794 = vpop.xlane.xlu0 %793
        %v795 = vmul.f32 %v794, %v788
        %v796 = vadd.f32 %v795, 1e-05
        %v797 = vrsqrt.pop %v796
        %v798 = vmul.f32 %v790, %v797
        %v799 = vlaneseq
        %v800 = vshrl.u32 %v799, 7
        %v801 = vsub.s32 2, %v800
        %v802 = vrot.slane %v195, %v801
        %v803 = vmul.f32 %v798, %v802
        %v804 = vlaneseq
        %v805 = vshrl.u32 %v804, 7
        %v806 = vsub.s32 3, %v805
        %v807 = vrot.slane %v195, %v806
        %v808 = vadd.f32 %v803, %v807
        %v809 = vld [vmem:[%s2] sm:$0xf]
        %v810 = vld [vmem:[%s2 + $0x4] sm:$0xf]
        %v811 = vld [vmem:[%s2 + $0x8] sm:$0xf]
        %v812 = vld [vmem:[%s2 + $0xc] sm:$0xf]
        %v813 = vld [vmem:[%s2 + $0x10] sm:$0xf]
        %v814 = vld [vmem:[%s2 + $0x14] sm:$0xf]
        %v815 = vld [vmem:[%s2 + $0x18] sm:$0xf]
        %v816 = vld [vmem:[%s2 + $0x1c] sm:$0xf]
        %v817 = vld [vmem:[%s2 + $0x20] sm:$0xf]
        %v818 = vld [vmem:[%s2 + $0x24] sm:$0xf]
        %v819 = vld [vmem:[%s2 + $0x28] sm:$0xf]
        %v820 = vld [vmem:[%s2 + $0x2c] sm:$0xf]
        %v821 = vpack.c.bf16 %v808, %v808
        %v822 = vlaneseq
        %v823 = vshrl.u32 %v822, 7
        %v824 = vsub.s32 4, %v823
        %v825 = vrot.slane %v195, %v824
        %v830 = vunpack.c.l.b16 %v809
        %v831 = vunpack.c.l.b16 %v810
        %v832 = vunpack.c.l.b16 %v811
        %v833 = vunpack.c.l.b16 %v812
        %v834 = vpack.c.b16 %v831, %v830
        %v835 = vpack.c.b16 %v833, %v832
        %v839 = vsel %vm217, %v821, 0
        %841 = vmatprep.subr.bf16.mxu0 0
        %842 = vmatpush1.bf16.msra.mxu0 %v834
        %843 = vmatprep.subr.bf16.mxu0 0
        %844 = vmatpush1.bf16.msra.mxu0 %v835
        %845 = vmatprep.subr.bf16.mxu0 0
        %846 = vmatpush1.bf16.msra.mxu0 0
        %847 = vmatprep.subr.bf16.mxu0 0
        %848 = vmatpush1.bf16.msra.mxu0 0
        %849 = vmatprep.subr.bf16.mxu0 0
        %850 = vmatpush1.bf16.msra.mxu0 0
        %851 = vmatprep.subr.bf16.mxu0 0
        %852 = vmatpush1.bf16.msra.mxu0 0
        %853 = vmatprep.subr.bf16.mxu0 0
        %854 = vmatpush1.bf16.msra.mxu0 0
        %855 = vmatprep.subr.bf16.mxu0 0
        %856 = vmatpush1.bf16.msra.mxu0 0
        %857 = vmatprep.subr.bf16.mxu0 0
        %858 = vmatpush1.bf16.msra.mxu0 0
        %859 = vmatprep.subr.bf16.mxu0 0
        %860 = vmatpush1.bf16.msra.mxu0 0
        %861 = vmatprep.subr.bf16.mxu0 0
        %862 = vmatpush1.bf16.msra.mxu0 0
        %863 = vmatprep.subr.bf16.mxu0 0
        %864 = vmatpush1.bf16.msra.mxu0 0
        %865 = vmatprep.subr.bf16.mxu0 0
        %866 = vmatpush1.bf16.msra.mxu0 0
        %867 = vmatprep.subr.bf16.mxu0 0
        %868 = vmatpush1.bf16.msra.mxu0 0
        %869 = vmatprep.subr.bf16.mxu0 0
        %870 = vmatpush1.bf16.msra.mxu0 0
        %871 = vmatprep.subr.bf16.mxu0 0
        %872 = vmatpush1.bf16.msra.mxu0 0
        %873 = vmatprep.mubr.bf16.mxu0 0
        %874 = vmatmul.mubr.bf16.gmra.mrb[0].mxu0 %v839
        %v875 = vpop.f32.mrb[0].mxu0
        %v876 = vadd.f32 %v825, %v875
        %v877 = vpop.f32.mrb[0].mxu0
        %v878 = vpop.f32.mrb[0].mxu0
        %v879 = vpop.f32.mrb[0].mxu0
        %880 = vdwg.mxu0
        %v881 = vmax.f32 %v876, 0.0
        %v882 = vpack.c.bf16 %v881, %v881
        %v883 = vlaneseq
        %v884 = vshrl.u32 %v883, 7
        %v885 = vsub.s32 5, %v884
        %v886 = vrot.slane %v195, %v885
        %v895 = vunpack.c.l.b16 %v813
        %v896 = vunpack.c.l.b16 %v814
        %v897 = vunpack.c.l.b16 %v815
        %v898 = vunpack.c.l.b16 %v816
        %v899 = vunpack.c.l.b16 %v817
        %v900 = vunpack.c.l.b16 %v818
        %v901 = vunpack.c.l.b16 %v819
        %v902 = vunpack.c.l.b16 %v820
        %v903 = vpack.c.b16 %v896, %v895
        %v904 = vpack.c.b16 %v898, %v897
        %v905 = vpack.c.b16 %v900, %v899
        %v906 = vpack.c.b16 %v902, %v901
        %vm911 = vcmask 523264
        %v913 = vsel %vm911, %v882, 0
        %915 = vmatprep.subr.bf16.mxu0 0
        %916 = vmatpush1.bf16.msra.mxu0 %v903
        %917 = vmatprep.subr.bf16.mxu0 0
        %918 = vmatpush1.bf16.msra.mxu0 %v904
        %919 = vmatprep.subr.bf16.mxu0 0
        %920 = vmatpush1.bf16.msra.mxu0 %v905
        %921 = vmatprep.subr.bf16.mxu0 0
        %922 = vmatpush1.bf16.msra.mxu0 %v906
        %923 = vmatprep.subr.bf16.mxu0 0
        %924 = vmatpush1.bf16.msra.mxu0 0
        %925 = vmatprep.subr.bf16.mxu0 0
        %926 = vmatpush1.bf16.msra.mxu0 0
        %927 = vmatprep.subr.bf16.mxu0 0
        %928 = vmatpush1.bf16.msra.mxu0 0
        %929 = vmatprep.subr.bf16.mxu0 0
        %930 = vmatpush1.bf16.msra.mxu0 0
        %931 = vmatprep.subr.bf16.mxu0 0
        %932 = vmatpush1.bf16.msra.mxu0 0
        %933 = vmatprep.subr.bf16.mxu0 0
        %934 = vmatpush1.bf16.msra.mxu0 0
        %935 = vmatprep.subr.bf16.mxu0 0
        %936 = vmatpush1.bf16.msra.mxu0 0
        %937 = vmatprep.subr.bf16.mxu0 0
        %938 = vmatpush1.bf16.msra.mxu0 0
        %939 = vmatprep.subr.bf16.mxu0 0
        %940 = vmatpush1.bf16.msra.mxu0 0
        %941 = vmatprep.subr.bf16.mxu0 0
        %942 = vmatpush1.bf16.msra.mxu0 0
        %943 = vmatprep.subr.bf16.mxu0 0
        %944 = vmatpush1.bf16.msra.mxu0 0
        %945 = vmatprep.subr.bf16.mxu0 0
        %946 = vmatpush1.bf16.msra.mxu0 0
        %947 = vmatprep.mubr.bf16.mxu0 0
        %948 = vmatmul.mubr.bf16.gmra.mrb[0].mxu0 %v913
        %v949 = vpop.f32.mrb[0].mxu0
        %v950 = vadd.f32 %v886, %v949
        %v951 = vpop.f32.mrb[0].mxu0
        %v952 = vpop.f32.mrb[0].mxu0
        %v953 = vpop.f32.mrb[0].mxu0
        %954 = vdwg.mxu0
        %v955 = vadd.f32 %v808, %v950
        %v956 = vsel %vm217, %v955, 0.0
        %957 = vadd.xlane.f32.xlu0 %v956
        %v958 = vpop.xlane.xlu0 %957
        %v959 = vmul.f32 %v958, %v788
        %v960 = vsub.f32 %v955, %v959
        %v961 = vmul.f32 %v960, %v960
        %v962 = vsel %vm217, %v961, 0.0
        %963 = vadd.xlane.f32.xlu0 %v962
        %v964 = vpop.xlane.xlu0 %963
        %v965 = vmul.f32 %v964, %v788
        %v966 = vadd.f32 %v965, 1e-05
        %v967 = vrsqrt.pop %v966
        %v968 = vmul.f32 %v960, %v967
        %v969 = vlaneseq
        %v970 = vshrl.u32 %v969, 7
        %v971 = vsub.s32 6, %v970
        %v972 = vrot.slane %v195, %v971
        %v973 = vmul.f32 %v968, %v972
        %v974 = vlaneseq
        %v975 = vshrl.u32 %v974, 7
        %v976 = vsub.s32 7, %v975
        %v977 = vrot.slane %v195, %v976
        %v978 = vadd.f32 %v973, %v977
        %979 = vst.msk [vmem:[%s188] sm:$0xff] %vm217, %v978
        %s980 = sand.u32 %s115, 1
        %s981 = scalar_lea.sflag [#allocation3], %s980
        %s982 = sand.u32 %s115, 1
        %s983 = smul.addr %s982, 8
        %s984 = scalar_lea.vmem [#allocation2], %s983
        // Predicated region
        $region37: #{tpu_custom_call.1} parent=35 // pred_check
          %p985 = pneg %p125
        $region38: #{tpu_custom_call.1} parent=35 // pred_check_branch
          %987 = sbr.rel (%p985) target = $region40
        $region39: #{tpu_custom_call.1} parent=35 // pred_region
          %s989 = ssub.s32 128, 128
          %990 = vsyncadd %s981, %s989
          %s991 = smul.addr %s18, 128
          %s992 = scalar_lea.hbm %s4, %s991
          %s994 = sshll.u32 %s984, 4
          %s995 = int_to_ptr.vmem [resolvable:$true] %s994
          %997 = dma.vmem_to_hbm [thread:$0]  %s995, 128, %s992, %s981
        $region40: #{tpu_custom_call.1} parent=35 // pred_fallthru
          _
      $region36: #{tpu_custom_call.1} parent=5 // pred_fallthru
        _
      %p998 = scmp.le.s32.totalorder 2, %s13
      // Predicated region
      $region41: #{tpu_custom_call.1} parent=5 // pred_check
        %p999 = pneg %p998
      $region42: #{tpu_custom_call.1} parent=5 // pred_check_branch
        %1001 = sbr.rel (%p999) target = $region44
      $region43: #{tpu_custom_call.1} parent=5 // pred_region
        %s1002 = ssub.s32 %s13, 2
        // Predicated region
        $region45: #{tpu_custom_call.1} parent=43 // pred_check
          %p1003 = pneg %p131
        $region46: #{tpu_custom_call.1} parent=43 // pred_check_branch
          %1005 = sbr.rel (%p1003) target = $region48
        $region47: #{tpu_custom_call.1} parent=43 // pred_region
          %s1006 = sand.u32 %s116, 1
          %s1007 = scalar_lea.sflag [#allocation3], %s1006
          %s1008 = sand.u32 %s116, 1
          %s1009 = smul.addr %s1008, 8
          %s1010 = scalar_lea.vmem [#allocation2], %s1009
          %1011 = dma.done %s1007, 128
        $region48: #{tpu_custom_call.1} parent=43 // pred_fallthru
          _
      $region44: #{tpu_custom_call.1} parent=5 // pred_fallthru
        _
    $region6: #{tpu_custom_call.1} parent=1 // loop_footer
      %s17 = sadd.s32 1, %s13
    $region7: #{tpu_custom_call.1} parent=1 // loop_footer_branch
      %12 = sbr.rel target = $region3
    $region8: #{tpu_custom_call.1} parent=1 // loop_exit
      _
    %1012 = vsyncpa [#allocation3], 1
    %s1013 = scalar_lea.sflag [#allocation3], 1
    %1014 = vsyncpa %s1013, 1

</llo_original>
